<compile_context>
chip_gen: v7x
topology: tpu7x:2x2x1
jax: 0.10.0
libtpu: 0.0.40
codegen_flags: <defaults>
</compile_context>

<pallas_src>
import functools

import jax
import jax.numpy as jnp
from jax.experimental import pallas as pl
from jax.experimental.pallas import tpu as pltpu


# ----------------------------------------------------------------------------
# Fused kernel: x -> (Linear+ReLU) x3 -> combined [mu | log_var] head
#               -> z = eps * exp(0.5*log_var) + mu
# ----------------------------------------------------------------------------
def _make_encoder_kernel(latent_dim):
    def kernel(x_ref,
               w1_ref, b1_ref,
               w2_ref, b2_ref,
               w3_ref, b3_ref,
               wh_ref, bh_ref,
               eps_ref,
               head_ref, z_ref):
        x = x_ref[...]
        h = jnp.maximum(
            jnp.dot(x, w1_ref[...], preferred_element_type=jnp.float32) + b1_ref[...], 0.0)
        h = jnp.maximum(
            jnp.dot(h, w2_ref[...], preferred_element_type=jnp.float32) + b2_ref[...], 0.0)
        h = jnp.maximum(
            jnp.dot(h, w3_ref[...], preferred_element_type=jnp.float32) + b3_ref[...], 0.0)

        # Single wide head matmul: [B, 2*D_lat] (lane-dense output slab).
        head = jnp.dot(h, wh_ref[...], preferred_element_type=jnp.float32) + bh_ref[...]
        head_ref[...] = head

        mu = head[:, :latent_dim]          # [B, D_lat]
        log_var = head[:, latent_dim:]     # [B, D_lat]
        std = jnp.exp(0.5 * log_var)       # == sqrt(exp(log_var))

        # eps: [L, B, D_lat]; broadcast mu/std over the latent-points axis.
        z_ref[...] = eps_ref[...] * std[None, :, :] + mu[None, :, :]
    return kernel


def _full_spec(shape):
    # Whole array resident in VMEM, same block every grid step.
    return pl.BlockSpec(shape, lambda *_: (0,) * len(shape))


@functools.partial(jax.jit, static_argnames=("num_latent_points",))
def vae_encoder_forward(x, params, eps_key, num_latent_points):
    """Returns (z, mu, log_var) mirroring VAEEncoder.forward."""
    (w1, b1, w2, b2, w3, b3, wmu, bmu, wlv, blv) = params
    B, _ = x.shape
    D_lat = wmu.shape[1]
    L = num_latent_points

    # Concatenate the mu and log_var heads -> one wider matmul, lane-dense output.
    w_head = jnp.concatenate([wmu, wlv], axis=1)   # [L3, 2*D_lat]
    b_head = jnp.concatenate([bmu, blv], axis=1)   # [1,  2*D_lat]

    # eps drawn in plain JAX (glue); passed into the fused kernel.
    # TODO(synk): could generate eps in-kernel with pltpu.prng_* to drop the HBM read.
    eps = jax.random.normal(eps_key, (L, B, D_lat), dtype=jnp.float32)

    in_arrays = (x, w1, b1, w2, b2, w3, b3, w_head, b_head, eps)
    in_specs = [_full_spec(a.shape) for a in in_arrays]

    head, z = pl.pallas_call(
        _make_encoder_kernel(D_lat),
        out_shape=(jax.ShapeDtypeStruct((B, 2 * D_lat), jnp.float32),
                   jax.ShapeDtypeStruct((L, B, D_lat), jnp.float32)),
        grid_spec=pltpu.PrefetchScalarGridSpec(
            num_scalar_prefetch=0,
            grid=(1,),
            in_specs=in_specs,
            out_specs=[_full_spec((B, 2 * D_lat)),
                       _full_spec((L, B, D_lat))],
        ),
        compiler_params=pltpu.CompilerParams(
            dimension_semantics=("arbitrary",)),
    )(*in_arrays)

    mu = head[:, :D_lat]
    log_var = head[:, D_lat:]
    return z, mu, log_var


def init_params(key, in_dim, l1, l2, l3, latent_dim):
    """Deterministic init mimicking PyTorch nn.Linear default (U(-1/sqrt(fan_in), ...)).
    Weights are stored transposed: [fan_in, fan_out]."""
    dims = [(in_dim, l1), (l1, l2), (l2, l3), (l3, latent_dim), (l3, latent_dim)]
    params = []
    keys = jax.random.split(key, 2 * len(dims))
    for i, (fi, fo) in enumerate(dims):
        bound = 1.0 / (fi ** 0.5)
        w = jax.random.uniform(keys[2 * i], (fi, fo), jnp.float32, -bound, bound)
        b = jax.random.uniform(keys[2 * i + 1], (1, fo), jnp.float32, -bound, bound)
        params.extend([w, b])
    return tuple(params)


def _reference_forward(x, params, eps):
    """Pure-JAX reference for correctness check."""
    (w1, b1, w2, b2, w3, b3, wmu, bmu, wlv, blv) = params
    h = jnp.maximum(x @ w1 + b1, 0.0)
    h = jnp.maximum(h @ w2 + b2, 0.0)
    h = jnp.maximum(h @ w3 + b3, 0.0)
    mu = h @ wmu + bmu
    log_var = h @ wlv + blv
    std = jnp.sqrt(jnp.exp(log_var))      # same as torch reference
    z = eps * std + mu
    return z, mu, log_var


if __name__ == "__main__":
    # Small shapes consistent with the FC encoder.
    B = 8                    # batch (rows of x)
    IN_DIM = 128             # in_dimension
    L1, L2, L3 = 64, 64, 64  # layer_1d, layer_2d, layer_3d
    LATENT = 32              # latent_dimension
    NUM_LATENT_POINTS = 4

    root = jax.random.PRNGKey(0)
    k_param, k_x, k_eps = jax.random.split(root, 3)

    params = init_params(k_param, IN_DIM, L1, L2, L3, LATENT)
    x = jax.random.normal(k_x, (B, IN_DIM), dtype=jnp.float32)

    z, mu, log_var = vae_encoder_forward(x, params, k_eps, NUM_LATENT_POINTS)
    jax.block_until_ready((z, mu, log_var))

    # Sanity check against pure-JAX reference (same eps draw).
    eps = jax.random.normal(k_eps, (NUM_LATENT_POINTS, B, LATENT), dtype=jnp.float32)
    z_ref, mu_ref, lv_ref = _reference_forward(x, params, eps)
    assert jnp.allclose(mu, mu_ref, atol=1e-5, rtol=1e-5)
    assert jnp.allclose(log_var, lv_ref, atol=1e-5, rtol=1e-5)
    assert jnp.allclose(z, z_ref, atol=1e-5, rtol=1e-5)
    assert z.shape == (NUM_LATENT_POINTS, B, LATENT)
    assert mu.shape == (B, LATENT) and log_var.shape == (B, LATENT)

    print("KERNEL_OK")
</pallas_src>

<mosaic_0001>
module attributes {stable_mosaic.version = 11 : i64} {
  func.func @kernel(%arg0: i32, %arg1: memref<8x128xf32, #tpu.memory_space<vmem>>, %arg2: memref<128x64xf32, #tpu.memory_space<vmem>>, %arg3: memref<1x64xf32, #tpu.memory_space<vmem>>, %arg4: memref<64x64xf32, #tpu.memory_space<vmem>>, %arg5: memref<1x64xf32, #tpu.memory_space<vmem>>, %arg6: memref<64x64xf32, #tpu.memory_space<vmem>>, %arg7: memref<1x64xf32, #tpu.memory_space<vmem>>, %arg8: memref<64x64xf32, #tpu.memory_space<vmem>>, %arg9: memref<1x64xf32, #tpu.memory_space<vmem>>, %arg10: memref<4x8x32xf32, #tpu.memory_space<vmem>>, %arg11: memref<8x64xf32, #tpu.memory_space<vmem>>, %arg12: memref<4x8x32xf32, #tpu.memory_space<vmem>>) attributes {dimension_semantics = [#tpu.dimension_semantics<arbitrary>], iteration_bounds = array<i64: 1>, scalar_prefetch = 0 : i64, scratch_operands = 0 : i64, tpu.core_type = #tpu.core_type<tc>, window_params = [{pipeline_mode = #tpu.pipeline_mode<synchronous>, transform_indices = @transform_0, window_bounds = array<i64: 8, 128>}, {pipeline_mode = #tpu.pipeline_mode<synchronous>, transform_indices = @transform_1, window_bounds = array<i64: 128, 64>}, {pipeline_mode = #tpu.pipeline_mode<synchronous>, transform_indices = @transform_2, window_bounds = array<i64: 1, 64>}, {pipeline_mode = #tpu.pipeline_mode<synchronous>, transform_indices = @transform_3, window_bounds = array<i64: 64, 64>}, {pipeline_mode = #tpu.pipeline_mode<synchronous>, transform_indices = @transform_4, window_bounds = array<i64: 1, 64>}, {pipeline_mode = #tpu.pipeline_mode<synchronous>, transform_indices = @transform_5, window_bounds = array<i64: 64, 64>}, {pipeline_mode = #tpu.pipeline_mode<synchronous>, transform_indices = @transform_6, window_bounds = array<i64: 1, 64>}, {pipeline_mode = #tpu.pipeline_mode<synchronous>, transform_indices = @transform_7, window_bounds = array<i64: 64, 64>}, {pipeline_mode = #tpu.pipeline_mode<synchronous>, transform_indices = @transform_8, window_bounds = array<i64: 1, 64>}, {pipeline_mode = #tpu.pipeline_mode<synchronous>, transform_indices = @transform_9, window_bounds = array<i64: 4, 8, 32>}, {pipeline_mode = #tpu.pipeline_mode<synchronous>, transform_indices = @transform_10, window_bounds = array<i64: 8, 64>}, {pipeline_mode = #tpu.pipeline_mode<synchronous>, transform_indices = @transform_11, window_bounds = array<i64: 4, 8, 32>}]} {
    %c0 = arith.constant 0 : index
    %c0_0 = arith.constant 0 : index
    %0 = vector.load %arg1[%c0, %c0_0] : memref<8x128xf32, #tpu.memory_space<vmem>>, vector<8x128xf32>
    %c0_1 = arith.constant 0 : index
    %c0_2 = arith.constant 0 : index
    %1 = vector.load %arg2[%c0_1, %c0_2] : memref<128x64xf32, #tpu.memory_space<vmem>>, vector<128x64xf32>
    %cst = arith.constant dense<0.000000e+00> : vector<8x64xf32>
    %2 = tpu.matmul %0, %1, %cst {dimension_numbers = #tpu.dot_dimension_numbers<[1], [0], [0], [1], [0, 0, 1, 1], [], []>} : vector<8x128xf32>, vector<128x64xf32>, vector<8x64xf32> -> vector<8x64xf32>
    %c0_3 = arith.constant 0 : index
    %c0_4 = arith.constant 0 : index
    %3 = vector.load %arg3[%c0_3, %c0_4] : memref<1x64xf32, #tpu.memory_space<vmem>>, vector<1x64xf32>
    %4 = vector.broadcast %3 : vector<1x64xf32> to vector<8x64xf32>
    %5 = arith.addf %2, %4 : vector<8x64xf32>
    %cst_5 = arith.constant 0.000000e+00 : f32
    %6 = vector.broadcast %cst_5 : f32 to vector<8x64xf32>
    %7 = arith.maximumf %5, %6 : vector<8x64xf32>
    %c0_6 = arith.constant 0 : index
    %c0_7 = arith.constant 0 : index
    %8 = vector.load %arg4[%c0_6, %c0_7] : memref<64x64xf32, #tpu.memory_space<vmem>>, vector<64x64xf32>
    %cst_8 = arith.constant dense<0.000000e+00> : vector<8x64xf32>
    %9 = tpu.matmul %7, %8, %cst_8 {dimension_numbers = #tpu.dot_dimension_numbers<[1], [0], [0], [1], [0, 0, 1, 1], [], []>} : vector<8x64xf32>, vector<64x64xf32>, vector<8x64xf32> -> vector<8x64xf32>
    %c0_9 = arith.constant 0 : index
    %c0_10 = arith.constant 0 : index
    %10 = vector.load %arg5[%c0_9, %c0_10] : memref<1x64xf32, #tpu.memory_space<vmem>>, vector<1x64xf32>
    %11 = vector.broadcast %10 : vector<1x64xf32> to vector<8x64xf32>
    %12 = arith.addf %9, %11 : vector<8x64xf32>
    %cst_11 = arith.constant 0.000000e+00 : f32
    %13 = vector.broadcast %cst_11 : f32 to vector<8x64xf32>
    %14 = arith.maximumf %12, %13 : vector<8x64xf32>
    %c0_12 = arith.constant 0 : index
    %c0_13 = arith.constant 0 : index
    %15 = vector.load %arg6[%c0_12, %c0_13] : memref<64x64xf32, #tpu.memory_space<vmem>>, vector<64x64xf32>
    %cst_14 = arith.constant dense<0.000000e+00> : vector<8x64xf32>
    %16 = tpu.matmul %14, %15, %cst_14 {dimension_numbers = #tpu.dot_dimension_numbers<[1], [0], [0], [1], [0, 0, 1, 1], [], []>} : vector<8x64xf32>, vector<64x64xf32>, vector<8x64xf32> -> vector<8x64xf32>
    %c0_15 = arith.constant 0 : index
    %c0_16 = arith.constant 0 : index
    %17 = vector.load %arg7[%c0_15, %c0_16] : memref<1x64xf32, #tpu.memory_space<vmem>>, vector<1x64xf32>
    %18 = vector.broadcast %17 : vector<1x64xf32> to vector<8x64xf32>
    %19 = arith.addf %16, %18 : vector<8x64xf32>
    %cst_17 = arith.constant 0.000000e+00 : f32
    %20 = vector.broadcast %cst_17 : f32 to vector<8x64xf32>
    %21 = arith.maximumf %19, %20 : vector<8x64xf32>
    %c0_18 = arith.constant 0 : index
    %c0_19 = arith.constant 0 : index
    %22 = vector.load %arg8[%c0_18, %c0_19] : memref<64x64xf32, #tpu.memory_space<vmem>>, vector<64x64xf32>
    %cst_20 = arith.constant dense<0.000000e+00> : vector<8x64xf32>
    %23 = tpu.matmul %21, %22, %cst_20 {dimension_numbers = #tpu.dot_dimension_numbers<[1], [0], [0], [1], [0, 0, 1, 1], [], []>} : vector<8x64xf32>, vector<64x64xf32>, vector<8x64xf32> -> vector<8x64xf32>
    %c0_21 = arith.constant 0 : index
    %c0_22 = arith.constant 0 : index
    %24 = vector.load %arg9[%c0_21, %c0_22] : memref<1x64xf32, #tpu.memory_space<vmem>>, vector<1x64xf32>
    %25 = vector.broadcast %24 : vector<1x64xf32> to vector<8x64xf32>
    %26 = arith.addf %23, %25 : vector<8x64xf32>
    %c0_23 = arith.constant 0 : index
    %c0_24 = arith.constant 0 : index
    %27 = vector.load %arg11[%c0_23, %c0_24] : memref<8x64xf32, #tpu.memory_space<vmem>>, vector<8x64xf32>
    tpu.vector_store %arg11[%c0_23, %c0_24], %26 {strides = array<i32>} : memref<8x64xf32, #tpu.memory_space<vmem>>, vector<8x64xf32>,
    %28 = vector.extract_strided_slice %26 {offsets = [0, 0], sizes = [8, 32], strides = [1, 1]} : vector<8x64xf32> to vector<8x32xf32>
    %29 = vector.extract_strided_slice %26 {offsets = [0, 32], sizes = [8, 32], strides = [1, 1]} : vector<8x64xf32> to vector<8x32xf32>
    %cst_25 = arith.constant 5.000000e-01 : f32
    %30 = vector.broadcast %cst_25 : f32 to vector<8x32xf32>
    %31 = arith.mulf %30, %29 : vector<8x32xf32>
    %32 = math.exp %31 : vector<8x32xf32>
    %c0_26 = arith.constant 0 : index
    %c0_27 = arith.constant 0 : index
    %c0_28 = arith.constant 0 : index
    %33 = vector.load %arg10[%c0_26, %c0_27, %c0_28] : memref<4x8x32xf32, #tpu.memory_space<vmem>>, vector<4x8x32xf32>
    %34 = vector.shape_cast %32 : vector<8x32xf32> to vector<1x8x32xf32>
    %35 = vector.broadcast %34 : vector<1x8x32xf32> to vector<4x8x32xf32>
    %36 = arith.mulf %33, %35 : vector<4x8x32xf32>
    %37 = vector.shape_cast %28 : vector<8x32xf32> to vector<1x8x32xf32>
    %38 = vector.broadcast %37 : vector<1x8x32xf32> to vector<4x8x32xf32>
    %39 = arith.addf %36, %38 : vector<4x8x32xf32>
    %c0_29 = arith.constant 0 : index
    %c0_30 = arith.constant 0 : index
    %c0_31 = arith.constant 0 : index
    %40 = vector.load %arg12[%c0_29, %c0_30, %c0_31] : memref<4x8x32xf32, #tpu.memory_space<vmem>>, vector<4x8x32xf32>
    tpu.vector_store %arg12[%c0_29, %c0_30, %c0_31], %39 {strides = array<i32>} : memref<4x8x32xf32, #tpu.memory_space<vmem>>, vector<4x8x32xf32>,
    return
  }
  func.func @transform_0(%arg0: i32) -> (i32, i32) {
    %c0_i32 = arith.constant 0 : i32
    %c0_i32_0 = arith.constant 0 : i32
    %c0_i32_1 = arith.constant 0 : i32
    return %c0_i32, %c0_i32_0 : i32, i32
  }
  func.func @transform_1(%arg0: i32) -> (i32, i32) {
    %c0_i32 = arith.constant 0 : i32
    %c0_i32_0 = arith.constant 0 : i32
    %c0_i32_1 = arith.constant 0 : i32
    return %c0_i32, %c0_i32_0 : i32, i32
  }
  func.func @transform_2(%arg0: i32) -> (i32, i32) {
    %c0_i32 = arith.constant 0 : i32
    %c0_i32_0 = arith.constant 0 : i32
    %c0_i32_1 = arith.constant 0 : i32
    return %c0_i32, %c0_i32_0 : i32, i32
  }
  func.func @transform_3(%arg0: i32) -> (i32, i32) {
    %c0_i32 = arith.constant 0 : i32
    %c0_i32_0 = arith.constant 0 : i32
    %c0_i32_1 = arith.constant 0 : i32
    return %c0_i32, %c0_i32_0 : i32, i32
  }
  func.func @transform_4(%arg0: i32) -> (i32, i32) {
    %c0_i32 = arith.constant 0 : i32
    %c0_i32_0 = arith.constant 0 : i32
    %c0_i32_1 = arith.constant 0 : i32
    return %c0_i32, %c0_i32_0 : i32, i32
  }
  func.func @transform_5(%arg0: i32) -> (i32, i32) {
    %c0_i32 = arith.constant 0 : i32
    %c0_i32_0 = arith.constant 0 : i32
    %c0_i32_1 = arith.constant 0 : i32
    return %c0_i32, %c0_i32_0 : i32, i32
  }
  func.func @transform_6(%arg0: i32) -> (i32, i32) {
    %c0_i32 = arith.constant 0 : i32
    %c0_i32_0 = arith.constant 0 : i32
    %c0_i32_1 = arith.constant 0 : i32
    return %c0_i32, %c0_i32_0 : i32, i32
  }
  func.func @transform_7(%arg0: i32) -> (i32, i32) {
    %c0_i32 = arith.constant 0 : i32
    %c0_i32_0 = arith.constant 0 : i32
    %c0_i32_1 = arith.constant 0 : i32
    return %c0_i32, %c0_i32_0 : i32, i32
  }
  func.func @transform_8(%arg0: i32) -> (i32, i32) {
    %c0_i32 = arith.constant 0 : i32
    %c0_i32_0 = arith.constant 0 : i32
    %c0_i32_1 = arith.constant 0 : i32
    return %c0_i32, %c0_i32_0 : i32, i32
  }
  func.func @transform_9(%arg0: i32) -> (i32, i32, i32) {
    %c0_i32 = arith.constant 0 : i32
    %c0_i32_0 = arith.constant 0 : i32
    %c0_i32_1 = arith.constant 0 : i32
    %c0_i32_2 = arith.constant 0 : i32
    return %c0_i32, %c0_i32_0, %c0_i32_1 : i32, i32, i32
  }
  func.func @transform_10(%arg0: i32) -> (i32, i32) {
    %c0_i32 = arith.constant 0 : i32
    %c0_i32_0 = arith.constant 0 : i32
    %c0_i32_1 = arith.constant 0 : i32
    return %c0_i32, %c0_i32_0 : i32, i32
  }
  func.func @transform_11(%arg0: i32) -> (i32, i32, i32) {
    %c0_i32 = arith.constant 0 : i32
    %c0_i32_0 = arith.constant 0 : i32
    %c0_i32_1 = arith.constant 0 : i32
    %c0_i32_2 = arith.constant 0 : i32
    return %c0_i32, %c0_i32_0, %c0_i32_1 : i32, i32, i32
  }
}

</mosaic_0001>

<llo_original>
// kernel: vae_encoder_forward.1
$region0: #{vae_encoder_forward.1}
  #allocation0 [shape = 'u32[]', space=smem, size = 0x4, offset = 0x4, fixed_abs, tag = 'smem constant byte address 0x4 - core index']
  #allocation1 [shape = 'u32[144,128]{1,0:T(1,128)}', space=vmem, size = 0x12000, scoped, tag = 'internal scratch']
  %s0 = inlined_call_operand.vmem [shape: f32[8,128], index: 0, kind: input, shape index: {}]
  %s1 = inlined_call_operand.vmem [shape: f32[128,64], index: 1, kind: input, shape index: {}]
  %s2 = inlined_call_operand.vmem [shape: f32[1,64], index: 2, kind: input, shape index: {}]
  %s3 = inlined_call_operand.vmem [shape: f32[64,64], index: 3, kind: input, shape index: {}]
  %s4 = inlined_call_operand.vmem [shape: f32[1,64], index: 4, kind: input, shape index: {}]
  %s5 = inlined_call_operand.vmem [shape: f32[64,64], index: 5, kind: input, shape index: {}]
  %s6 = inlined_call_operand.vmem [shape: f32[1,64], index: 6, kind: input, shape index: {}]
  %s7 = inlined_call_operand.vmem [shape: f32[64,64], index: 7, kind: input, shape index: {}]
  %s8 = inlined_call_operand.vmem [shape: f32[1,64], index: 8, kind: input, shape index: {}]
  %s9 = inlined_call_operand.vmem [shape: f32[4,8,32], index: 9, kind: input, shape index: {}]
  %s10 = inlined_call_operand.vmem [shape: f32[8,64], index: 10, kind: output, shape index: {0}]
  %s11 = inlined_call_operand.hbm [shape: f32[4,8,32], index: 11, kind: output, shape index: {1}]
  %12 = xla_tuple %s10, %s11
  %s13 = sld [smem:[#allocation0]]
  $region58: #{vae_encoder_forward.1} parent=0
    _
  %s15 = ssub.s32 1, %s13
  %s16 = scalar_select 0, %s15, %s13
  $region1: #{vae_encoder_forward.1} parent=0
    #allocation2 [shape = 'u8[16384]{0}', space=vmem, size = 0x4000, scoped, tag = 'output window, operand 1, single buffered']
    #allocation3 [shape = 's32[1]{0}', space=sflag, size = 0x4, scoped, tag = 'scoped memory for vae_encoder_forward.1']
    %17 = vsyncpa [#allocation3], 0
    // Predicated region
    $region2: #{vae_encoder_forward.1} parent=1 // pred_check
      _
    $region3: #{vae_encoder_forward.1} parent=1 // pred_check_branch
      %19 = sbr.rel (0) target = $region5
    $region4: #{vae_encoder_forward.1} parent=1 // pred_region
      _
    $region5: #{vae_encoder_forward.1} parent=1 // pred_fallthru
      _
    // Predicated region
    $region6: #{vae_encoder_forward.1} parent=1 // pred_check
      _
    $region7: #{vae_encoder_forward.1} parent=1 // pred_check_branch
      %21 = sbr.rel (0) target = $region9
    $region8: #{vae_encoder_forward.1} parent=1 // pred_region
      _
    $region9: #{vae_encoder_forward.1} parent=1 // pred_fallthru
      _
    // Predicated region
    $region10: #{vae_encoder_forward.1} parent=1 // pred_check
      _
    $region11: #{vae_encoder_forward.1} parent=1 // pred_check_branch
      %23 = sbr.rel (0) target = $region13
    $region12: #{vae_encoder_forward.1} parent=1 // pred_region
      _
    $region13: #{vae_encoder_forward.1} parent=1 // pred_fallthru
      _
    // Predicated region
    $region14: #{vae_encoder_forward.1} parent=1 // pred_check
      _
    $region15: #{vae_encoder_forward.1} parent=1 // pred_check_branch
      %25 = sbr.rel (0) target = $region17
    $region16: #{vae_encoder_forward.1} parent=1 // pred_region
      _
    $region17: #{vae_encoder_forward.1} parent=1 // pred_fallthru
      _
    // Predicated region
    $region18: #{vae_encoder_forward.1} parent=1 // pred_check
      _
    $region19: #{vae_encoder_forward.1} parent=1 // pred_check_branch
      %27 = sbr.rel (0) target = $region21
    $region20: #{vae_encoder_forward.1} parent=1 // pred_region
      _
    $region21: #{vae_encoder_forward.1} parent=1 // pred_fallthru
      _
    // Predicated region
    $region22: #{vae_encoder_forward.1} parent=1 // pred_check
      _
    $region23: #{vae_encoder_forward.1} parent=1 // pred_check_branch
      %29 = sbr.rel (0) target = $region25
    $region24: #{vae_encoder_forward.1} parent=1 // pred_region
      _
    $region25: #{vae_encoder_forward.1} parent=1 // pred_fallthru
      _
    // Predicated region
    $region26: #{vae_encoder_forward.1} parent=1 // pred_check
      _
    $region27: #{vae_encoder_forward.1} parent=1 // pred_check_branch
      %31 = sbr.rel (0) target = $region29
    $region28: #{vae_encoder_forward.1} parent=1 // pred_region
      _
    $region29: #{vae_encoder_forward.1} parent=1 // pred_fallthru
      _
    // Predicated region
    $region30: #{vae_encoder_forward.1} parent=1 // pred_check
      _
    $region31: #{vae_encoder_forward.1} parent=1 // pred_check_branch
      %33 = sbr.rel (0) target = $region33
    $region32: #{vae_encoder_forward.1} parent=1 // pred_region
      _
    $region33: #{vae_encoder_forward.1} parent=1 // pred_fallthru
      _
    // Predicated region
    $region34: #{vae_encoder_forward.1} parent=1 // pred_check
      _
    $region35: #{vae_encoder_forward.1} parent=1 // pred_check_branch
      %35 = sbr.rel (0) target = $region37
    $region36: #{vae_encoder_forward.1} parent=1 // pred_region
      _
    $region37: #{vae_encoder_forward.1} parent=1 // pred_fallthru
      _
    // Predicated region
    $region38: #{vae_encoder_forward.1} parent=1 // pred_check
      _
    $region39: #{vae_encoder_forward.1} parent=1 // pred_check_branch
      %37 = sbr.rel (0) target = $region41
    $region40: #{vae_encoder_forward.1} parent=1 // pred_region
      _
    $region41: #{vae_encoder_forward.1} parent=1 // pred_fallthru
      _
    %v38 = vld [vmem:[%s0] sm:$0xff]
    %v39 = vld [vmem:[%s1] sm:$0xff]
    %v40 = vld [vmem:[%s1 + $0x8] sm:$0xff]
    %v41 = vld [vmem:[%s1 + $0x10] sm:$0xff]
    %v42 = vld [vmem:[%s1 + $0x18] sm:$0xff]
    %v43 = vld [vmem:[%s1 + $0x20] sm:$0xff]
    %v44 = vld [vmem:[%s1 + $0x28] sm:$0xff]
    %v45 = vld [vmem:[%s1 + $0x30] sm:$0xff]
    %v46 = vld [vmem:[%s1 + $0x38] sm:$0xff]
    %v47 = vld [vmem:[%s1 + $0x40] sm:$0xff]
    %v48 = vld [vmem:[%s1 + $0x48] sm:$0xff]
    %v49 = vld [vmem:[%s1 + $0x50] sm:$0xff]
    %v50 = vld [vmem:[%s1 + $0x58] sm:$0xff]
    %v51 = vld [vmem:[%s1 + $0x60] sm:$0xff]
    %v52 = vld [vmem:[%s1 + $0x68] sm:$0xff]
    %v53 = vld [vmem:[%s1 + $0x70] sm:$0xff]
    %v54 = vld [vmem:[%s1 + $0x78] sm:$0xff]
    %v55 = vld [vmem:[%s2] sm:$0x1]
    %v57 = vlaneseq
    %v58 = vshrl.u32 %v57, 7
    %v59 = vsub.s32 0, %v58
    %v60 = vrot.slane %v55, %v59
    %62 = vmatprep.subr.mxu0 0.0
    %63 = vmatpush1.msra.mxu0 %v39
    %64 = vmatprep.subr.mxu0 0.0
    %65 = vmatpush1.msra.mxu0 %v40
    %66 = vmatprep.subr.mxu0 0.0
    %67 = vmatpush1.msra.mxu0 %v41
    %68 = vmatprep.subr.mxu0 0.0
    %69 = vmatpush1.msra.mxu0 %v42
    %70 = vmatprep.subr.mxu0 0.0
    %71 = vmatpush1.msra.mxu0 %v43
    %72 = vmatprep.subr.mxu0 0.0
    %73 = vmatpush1.msra.mxu0 %v44
    %74 = vmatprep.subr.mxu0 0.0
    %75 = vmatpush1.msra.mxu0 %v45
    %76 = vmatprep.subr.mxu0 0.0
    %77 = vmatpush1.msra.mxu0 %v46
    %78 = vmatprep.subr.mxu0 0.0
    %79 = vmatpush1.msra.mxu0 %v47
    %80 = vmatprep.subr.mxu0 0.0
    %81 = vmatpush1.msra.mxu0 %v48
    %82 = vmatprep.subr.mxu0 0.0
    %83 = vmatpush1.msra.mxu0 %v49
    %84 = vmatprep.subr.mxu0 0.0
    %85 = vmatpush1.msra.mxu0 %v50
    %86 = vmatprep.subr.mxu0 0.0
    %87 = vmatpush1.msra.mxu0 %v51
    %88 = vmatprep.subr.mxu0 0.0
    %89 = vmatpush1.msra.mxu0 %v52
    %90 = vmatprep.subr.mxu0 0.0
    %91 = vmatpush1.msra.mxu0 %v53
    %92 = vmatprep.subr.mxu0 0.0
    %93 = vmatpush1.msra.mxu0 %v54
    %94 = vmatprep.subr.mxu0 0.0
    %95 = vmatpush1.msra.mxu0 0.0
    %96 = vmatprep.subr.mxu0 0.0
    %97 = vmatpush1.msra.mxu0 0.0
    %98 = vmatprep.subr.mxu0 0.0
    %99 = vmatpush1.msra.mxu0 0.0
    %100 = vmatprep.subr.mxu0 0.0
    %101 = vmatpush1.msra.mxu0 0.0
    %102 = vmatprep.subr.mxu0 0.0
    %103 = vmatpush1.msra.mxu0 0.0
    %104 = vmatprep.subr.mxu0 0.0
    %105 = vmatpush1.msra.mxu0 0.0
    %106 = vmatprep.subr.mxu0 0.0
    %107 = vmatpush1.msra.mxu0 0.0
    %108 = vmatprep.subr.mxu0 0.0
    %109 = vmatpush1.msra.mxu0 0.0
    %110 = vmatprep.subr.mxu0 0.0
    %111 = vmatpush1.msra.mxu0 0.0
    %112 = vmatprep.subr.mxu0 0.0
    %113 = vmatpush1.msra.mxu0 0.0
    %114 = vmatprep.subr.mxu0 0.0
    %115 = vmatpush1.msra.mxu0 0.0
    %116 = vmatprep.subr.mxu0 0.0
    %117 = vmatpush1.msra.mxu0 0.0
    %118 = vmatprep.subr.mxu0 0.0
    %119 = vmatpush1.msra.mxu0 0.0
    %120 = vmatprep.subr.mxu0 0.0
    %121 = vmatpush1.msra.mxu0 0.0
    %122 = vmatprep.subr.mxu0 0.0
    %123 = vmatpush1.msra.mxu0 0.0
    %124 = vmatprep.subr.mxu0 0.0
    %125 = vmatpush1.msra.mxu0 0.0
    %126 = vmatprep.mubr.f32.mxu0 0.0
    %127 = vmatmul.mubr.f32.gmra.mrb[0].mxu0 %v38
    %v128 = vpop.f32.mrb[0].mxu0
    %v129 = vadd.f32 %v60, %v128
    %v130 = vpop.f32.mrb[0].mxu0
    %131 = vdwg.mxu0
    %v132 = vmax.f32 %v129, 0.0
    %v133 = vld [vmem:[%s3] sm:$0xff]
    %v134 = vld [vmem:[%s3 + $0x8] sm:$0xff]
    %v135 = vld [vmem:[%s3 + $0x10] sm:$0xff]
    %v136 = vld [vmem:[%s3 + $0x18] sm:$0xff]
    %v137 = vld [vmem:[%s3 + $0x20] sm:$0xff]
    %v138 = vld [vmem:[%s3 + $0x28] sm:$0xff]
    %v139 = vld [vmem:[%s3 + $0x30] sm:$0xff]
    %v140 = vld [vmem:[%s3 + $0x38] sm:$0xff]
    %v141 = vld [vmem:[%s4] sm:$0x1]
    %v143 = vlaneseq
    %v144 = vshrl.u32 %v143, 7
    %v145 = vsub.s32 0, %v144
    %v146 = vrot.slane %v141, %v145
    %vm148 = vcmask 523264
    %v150 = vsel %vm148, %v132, 0
    %152 = vmatprep.subr.mxu0 0.0
    %153 = vmatpush1.msra.mxu0 %v133
    %154 = vmatprep.subr.mxu0 0.0
    %155 = vmatpush1.msra.mxu0 %v134
    %156 = vmatprep.subr.mxu0 0.0
    %157 = vmatpush1.msra.mxu0 %v135
    %158 = vmatprep.subr.mxu0 0.0
    %159 = vmatpush1.msra.mxu0 %v136
    %160 = vmatprep.subr.mxu0 0.0
    %161 = vmatpush1.msra.mxu0 %v137
    %162 = vmatprep.subr.mxu0 0.0
    %163 = vmatpush1.msra.mxu0 %v138
    %164 = vmatprep.subr.mxu0 0.0
    %165 = vmatpush1.msra.mxu0 %v139
    %166 = vmatprep.subr.mxu0 0.0
    %167 = vmatpush1.msra.mxu0 %v140
    %168 = vmatprep.subr.mxu0 0.0
    %169 = vmatpush1.msra.mxu0 0.0
    %170 = vmatprep.subr.mxu0 0.0
    %171 = vmatpush1.msra.mxu0 0.0
    %172 = vmatprep.subr.mxu0 0.0
    %173 = vmatpush1.msra.mxu0 0.0
    %174 = vmatprep.subr.mxu0 0.0
    %175 = vmatpush1.msra.mxu0 0.0
    %176 = vmatprep.subr.mxu0 0.0
    %177 = vmatpush1.msra.mxu0 0.0
    %178 = vmatprep.subr.mxu0 0.0
    %179 = vmatpush1.msra.mxu0 0.0
    %180 = vmatprep.subr.mxu0 0.0
    %181 = vmatpush1.msra.mxu0 0.0
    %182 = vmatprep.subr.mxu0 0.0
    %183 = vmatpush1.msra.mxu0 0.0
    %184 = vmatprep.subr.mxu0 0.0
    %185 = vmatpush1.msra.mxu0 0.0
    %186 = vmatprep.subr.mxu0 0.0
    %187 = vmatpush1.msra.mxu0 0.0
    %188 = vmatprep.subr.mxu0 0.0
    %189 = vmatpush1.msra.mxu0 0.0
    %190 = vmatprep.subr.mxu0 0.0
    %191 = vmatpush1.msra.mxu0 0.0
    %192 = vmatprep.subr.mxu0 0.0
    %193 = vmatpush1.msra.mxu0 0.0
    %194 = vmatprep.subr.mxu0 0.0
    %195 = vmatpush1.msra.mxu0 0.0
    %196 = vmatprep.subr.mxu0 0.0
    %197 = vmatpush1.msra.mxu0 0.0
    %198 = vmatprep.subr.mxu0 0.0
    %199 = vmatpush1.msra.mxu0 0.0
    %200 = vmatprep.subr.mxu0 0.0
    %201 = vmatpush1.msra.mxu0 0.0
    %202 = vmatprep.subr.mxu0 0.0
    %203 = vmatpush1.msra.mxu0 0.0
    %204 = vmatprep.subr.mxu0 0.0
    %205 = vmatpush1.msra.mxu0 0.0
    %206 = vmatprep.subr.mxu0 0.0
    %207 = vmatpush1.msra.mxu0 0.0
    %208 = vmatprep.subr.mxu0 0.0
    %209 = vmatpush1.msra.mxu0 0.0
    %210 = vmatprep.subr.mxu0 0.0
    %211 = vmatpush1.msra.mxu0 0.0
    %212 = vmatprep.subr.mxu0 0.0
    %213 = vmatpush1.msra.mxu0 0.0
    %214 = vmatprep.subr.mxu0 0.0
    %215 = vmatpush1.msra.mxu0 0.0
    %216 = vmatprep.mubr.f32.mxu0 0.0
    %217 = vmatmul.mubr.f32.gmra.mrb[0].mxu0 %v150
    %v218 = vpop.f32.mrb[0].mxu0
    %v219 = vadd.f32 %v146, %v218
    %v220 = vpop.f32.mrb[0].mxu0
    %221 = vdwg.mxu0
    %v222 = vmax.f32 %v219, 0.0
    %v223 = vld [vmem:[%s5] sm:$0xff]
    %v224 = vld [vmem:[%s5 + $0x8] sm:$0xff]
    %v225 = vld [vmem:[%s5 + $0x10] sm:$0xff]
    %v226 = vld [vmem:[%s5 + $0x18] sm:$0xff]
    %v227 = vld [vmem:[%s5 + $0x20] sm:$0xff]
    %v228 = vld [vmem:[%s5 + $0x28] sm:$0xff]
    %v229 = vld [vmem:[%s5 + $0x30] sm:$0xff]
    %v230 = vld [vmem:[%s5 + $0x38] sm:$0xff]
    %v231 = vld [vmem:[%s6] sm:$0x1]
    %v233 = vlaneseq
    %v234 = vshrl.u32 %v233, 7
    %v235 = vsub.s32 0, %v234
    %v236 = vrot.slane %v231, %v235
    %v239 = vsel %vm148, %v222, 0
    %241 = vmatprep.subr.mxu0 0.0
    %242 = vmatpush1.msra.mxu0 %v223
    %243 = vmatprep.subr.mxu0 0.0
    %244 = vmatpush1.msra.mxu0 %v224
    %245 = vmatprep.subr.mxu0 0.0
    %246 = vmatpush1.msra.mxu0 %v225
    %247 = vmatprep.subr.mxu0 0.0
    %248 = vmatpush1.msra.mxu0 %v226
    %249 = vmatprep.subr.mxu0 0.0
    %250 = vmatpush1.msra.mxu0 %v227
    %251 = vmatprep.subr.mxu0 0.0
    %252 = vmatpush1.msra.mxu0 %v228
    %253 = vmatprep.subr.mxu0 0.0
    %254 = vmatpush1.msra.mxu0 %v229
    %255 = vmatprep.subr.mxu0 0.0
    %256 = vmatpush1.msra.mxu0 %v230
    %257 = vmatprep.subr.mxu0 0.0
    %258 = vmatpush1.msra.mxu0 0.0
    %259 = vmatprep.subr.mxu0 0.0
    %260 = vmatpush1.msra.mxu0 0.0
    %261 = vmatprep.subr.mxu0 0.0
    %262 = vmatpush1.msra.mxu0 0.0
    %263 = vmatprep.subr.mxu0 0.0
    %264 = vmatpush1.msra.mxu0 0.0
    %265 = vmatprep.subr.mxu0 0.0
    %266 = vmatpush1.msra.mxu0 0.0
    %267 = vmatprep.subr.mxu0 0.0
    %268 = vmatpush1.msra.mxu0 0.0
    %269 = vmatprep.subr.mxu0 0.0
    %270 = vmatpush1.msra.mxu0 0.0
    %271 = vmatprep.subr.mxu0 0.0
    %272 = vmatpush1.msra.mxu0 0.0
    %273 = vmatprep.subr.mxu0 0.0
    %274 = vmatpush1.msra.mxu0 0.0
    %275 = vmatprep.subr.mxu0 0.0
    %276 = vmatpush1.msra.mxu0 0.0
    %277 = vmatprep.subr.mxu0 0.0
    %278 = vmatpush1.msra.mxu0 0.0
    %279 = vmatprep.subr.mxu0 0.0
    %280 = vmatpush1.msra.mxu0 0.0
    %281 = vmatprep.subr.mxu0 0.0
    %282 = vmatpush1.msra.mxu0 0.0
    %283 = vmatprep.subr.mxu0 0.0
    %284 = vmatpush1.msra.mxu0 0.0
    %285 = vmatprep.subr.mxu0 0.0
    %286 = vmatpush1.msra.mxu0 0.0
    %287 = vmatprep.subr.mxu0 0.0
    %288 = vmatpush1.msra.mxu0 0.0
    %289 = vmatprep.subr.mxu0 0.0
    %290 = vmatpush1.msra.mxu0 0.0
    %291 = vmatprep.subr.mxu0 0.0
    %292 = vmatpush1.msra.mxu0 0.0
    %293 = vmatprep.subr.mxu0 0.0
    %294 = vmatpush1.msra.mxu0 0.0
    %295 = vmatprep.subr.mxu0 0.0
    %296 = vmatpush1.msra.mxu0 0.0
    %297 = vmatprep.subr.mxu0 0.0
    %298 = vmatpush1.msra.mxu0 0.0
    %299 = vmatprep.subr.mxu0 0.0
    %300 = vmatpush1.msra.mxu0 0.0
    %301 = vmatprep.subr.mxu0 0.0
    %302 = vmatpush1.msra.mxu0 0.0
    %303 = vmatprep.subr.mxu0 0.0
    %304 = vmatpush1.msra.mxu0 0.0
    %305 = vmatprep.mubr.f32.mxu0 0.0
    %306 = vmatmul.mubr.f32.gmra.mrb[0].mxu0 %v239
    %v307 = vpop.f32.mrb[0].mxu0
    %v308 = vadd.f32 %v236, %v307
    %v309 = vpop.f32.mrb[0].mxu0
    %310 = vdwg.mxu0
    %v311 = vmax.f32 %v308, 0.0
    %v312 = vld [vmem:[%s7] sm:$0xff]
    %v313 = vld [vmem:[%s7 + $0x8] sm:$0xff]
    %v314 = vld [vmem:[%s7 + $0x10] sm:$0xff]
    %v315 = vld [vmem:[%s7 + $0x18] sm:$0xff]
    %v316 = vld [vmem:[%s7 + $0x20] sm:$0xff]
    %v317 = vld [vmem:[%s7 + $0x28] sm:$0xff]
    %v318 = vld [vmem:[%s7 + $0x30] sm:$0xff]
    %v319 = vld [vmem:[%s7 + $0x38] sm:$0xff]
    %v320 = vld [vmem:[%s8] sm:$0x1]
    %v322 = vlaneseq
    %v323 = vshrl.u32 %v322, 7
    %v324 = vsub.s32 0, %v323
    %v325 = vrot.slane %v320, %v324
    %v328 = vsel %vm148, %v311, 0
    %330 = vmatprep.subr.mxu0 0.0
    %331 = vmatpush1.msra.mxu0 %v312
    %332 = vmatprep.subr.mxu0 0.0
    %333 = vmatpush1.msra.mxu0 %v313
    %334 = vmatprep.subr.mxu0 0.0
    %335 = vmatpush1.msra.mxu0 %v314
    %336 = vmatprep.subr.mxu0 0.0
    %337 = vmatpush1.msra.mxu0 %v315
    %338 = vmatprep.subr.mxu0 0.0
    %339 = vmatpush1.msra.mxu0 %v316
    %340 = vmatprep.subr.mxu0 0.0
    %341 = vmatpush1.msra.mxu0 %v317
    %342 = vmatprep.subr.mxu0 0.0
    %343 = vmatpush1.msra.mxu0 %v318
    %344 = vmatprep.subr.mxu0 0.0
    %345 = vmatpush1.msra.mxu0 %v319
    %346 = vmatprep.subr.mxu0 0.0
    %347 = vmatpush1.msra.mxu0 0.0
    %348 = vmatprep.subr.mxu0 0.0
    %349 = vmatpush1.msra.mxu0 0.0
    %350 = vmatprep.subr.mxu0 0.0
    %351 = vmatpush1.msra.mxu0 0.0
    %352 = vmatprep.subr.mxu0 0.0
    %353 = vmatpush1.msra.mxu0 0.0
    %354 = vmatprep.subr.mxu0 0.0
    %355 = vmatpush1.msra.mxu0 0.0
    %356 = vmatprep.subr.mxu0 0.0
    %357 = vmatpush1.msra.mxu0 0.0
    %358 = vmatprep.subr.mxu0 0.0
    %359 = vmatpush1.msra.mxu0 0.0
    %360 = vmatprep.subr.mxu0 0.0
    %361 = vmatpush1.msra.mxu0 0.0
    %362 = vmatprep.subr.mxu0 0.0
    %363 = vmatpush1.msra.mxu0 0.0
    %364 = vmatprep.subr.mxu0 0.0
    %365 = vmatpush1.msra.mxu0 0.0
    %366 = vmatprep.subr.mxu0 0.0
    %367 = vmatpush1.msra.mxu0 0.0
    %368 = vmatprep.subr.mxu0 0.0
    %369 = vmatpush1.msra.mxu0 0.0
    %370 = vmatprep.subr.mxu0 0.0
    %371 = vmatpush1.msra.mxu0 0.0
    %372 = vmatprep.subr.mxu0 0.0
    %373 = vmatpush1.msra.mxu0 0.0
    %374 = vmatprep.subr.mxu0 0.0
    %375 = vmatpush1.msra.mxu0 0.0
    %376 = vmatprep.subr.mxu0 0.0
    %377 = vmatpush1.msra.mxu0 0.0
    %378 = vmatprep.subr.mxu0 0.0
    %379 = vmatpush1.msra.mxu0 0.0
    %380 = vmatprep.subr.mxu0 0.0
    %381 = vmatpush1.msra.mxu0 0.0
    %382 = vmatprep.subr.mxu0 0.0
    %383 = vmatpush1.msra.mxu0 0.0
    %384 = vmatprep.subr.mxu0 0.0
    %385 = vmatpush1.msra.mxu0 0.0
    %386 = vmatprep.subr.mxu0 0.0
    %387 = vmatpush1.msra.mxu0 0.0
    %388 = vmatprep.subr.mxu0 0.0
    %389 = vmatpush1.msra.mxu0 0.0
    %390 = vmatprep.subr.mxu0 0.0
    %391 = vmatpush1.msra.mxu0 0.0
    %392 = vmatprep.subr.mxu0 0.0
    %393 = vmatpush1.msra.mxu0 0.0
    %394 = vmatprep.mubr.f32.mxu0 0.0
    %395 = vmatmul.mubr.f32.gmra.mrb[0].mxu0 %v328
    %v396 = vpop.f32.mrb[0].mxu0
    %v397 = vadd.f32 %v325, %v396
    %v398 = vpop.f32.mrb[0].mxu0
    %399 = vdwg.mxu0
    %400 = vst.msk [vmem:[%s10] sm:$0xff] %vm148, %v397
    %v401 = vmul.f32 %v397, 0.5
    %v402 = vmul.f32 %v401, 1.442695
    %v403 = vpow.pop %v402
    %v404 = vld [vmem:[%s9] sm:$0xff]
    %v405 = vld [vmem:[%s9 + $0x8] sm:$0xff]
    %v406 = vld [vmem:[%s9 + $0x10] sm:$0xff]
    %v407 = vld [vmem:[%s9 + $0x18] sm:$0xff]
    %409 = vrot.lane.b32.xlu0 %v403, 96
    %v410 = vpop.permute.xlu0 %409
    %v412 = vmul.f32 %v404, %v410
    %v413 = vmul.f32 %v405, %v410
    %v414 = vmul.f32 %v406, %v410
    %v415 = vmul.f32 %v407, %v410
    %v416 = vadd.f32 %v412, %v397
    %v417 = vadd.f32 %v413, %v397
    %v418 = vadd.f32 %v414, %v397
    %v419 = vadd.f32 %v415, %v397
    %vm420 = vcmask 261120
    %421 = vst.msk [vmem:[#allocation2] sm:$0xff] %vm420, %v416
    %422 = vst.msk [vmem:[#allocation2 + $0x8] sm:$0xff] %vm420, %v417
    %423 = vst.msk [vmem:[#allocation2 + $0x10] sm:$0xff] %vm420, %v418
    %424 = vst.msk [vmem:[#allocation2 + $0x18] sm:$0xff] %vm420, %v419
    // Predicated region
    $region42: #{vae_encoder_forward.1} parent=1 // pred_check
      _
    $region43: #{vae_encoder_forward.1} parent=1 // pred_check_branch
      %426 = sbr.rel (0) target = $region45
    $region44: #{vae_encoder_forward.1} parent=1 // pred_region
      _
    $region45: #{vae_encoder_forward.1} parent=1 // pred_fallthru
      _
    // Predicated region
    $region46: #{vae_encoder_forward.1} parent=1 // pred_check
      _
    $region47: #{vae_encoder_forward.1} parent=1 // pred_check_branch
      %428 = sbr.rel (0) target = $region49
    $region48: #{vae_encoder_forward.1} parent=1 // pred_region
      %s430 = ssub.s32 512, 512
      %431 = vsyncadd [#allocation3], %s430
      %s432 = sshll.u32 [#allocation2], 4
      %s433 = int_to_ptr.vmem [resolvable:$true] %s432
      %438 = dma.vmem_to_hbm [thread:$0]  %s433, 512, %s11, [#allocation3], 128, 128, 8
    $region49: #{vae_encoder_forward.1} parent=1 // pred_fallthru
      _
    // Predicated region
    $region50: #{vae_encoder_forward.1} parent=1 // pred_check
      _
    $region51: #{vae_encoder_forward.1} parent=1 // pred_check_branch
      %440 = sbr.rel (0) target = $region53
    $region52: #{vae_encoder_forward.1} parent=1 // pred_region
      _
    $region53: #{vae_encoder_forward.1} parent=1 // pred_fallthru
      _
    // Predicated region
    $region54: #{vae_encoder_forward.1} parent=1 // pred_check
      _
    $region55: #{vae_encoder_forward.1} parent=1 // pred_check_branch
      %442 = sbr.rel (0) target = $region57
    $region56: #{vae_encoder_forward.1} parent=1 // pred_region
      %443 = dma.done [#allocation3], 512
    $region57: #{vae_encoder_forward.1} parent=1 // pred_fallthru
      _
    %444 = vsyncpa [#allocation3], 1

</llo_original>
